<compile_context>
chip_gen: v7x
topology: tpu7x:2x2x1
jax: 0.10.0
libtpu: 0.0.40
codegen_flags: <defaults>
</compile_context>

<pallas_src>
import functools

import jax
import jax.numpy as jnp
from jax import lax
from jax.experimental import pallas as pl
from jax.experimental.pallas import tpu as pltpu

LN_EPS = 1e-5  # PyTorch nn.LayerNorm default

_MIN_TILE = 512        # amortize the ~0.35 us per-grid-step overhead
_MIN_GRID_STEPS = 8    # keep pipeline depth + v7x megacore split for huge N


def _round_up(x, m):
    return ((x + m - 1) // m) * m


def _score_kernel(x_ref, w1t_ref, b1_ref, g_ref, beta_ref, w2_ref, b2_ref,
                  s_ref, y_ref, *, matmul_precision):
    x = x_ref[...]

    # ---- user_fc: h = x @ W1 + b1 ; W1 pre-transposed to (D, E) in the wrapper ----
    h = jnp.dot(x, w1t_ref[...],
                precision=matmul_precision,
                preferred_element_type=jnp.float32) + b1_ref[...]

    # ---- LayerNorm over E (biased variance, eps inside rsqrt), all f32 ----
    # Cross-lane sums go through the (otherwise idle) MXU instead of the XLU:
    # matvec against a ones column.  HIGHEST precision keeps the sums ~f32-exact
    # so semantics match an exact mean/variance.
    E = h.shape[-1]
    inv_e = jnp.float32(1.0 / E)
    ones_col = jnp.ones((E, 1), dtype=jnp.float32)
    mean = jnp.dot(h, ones_col,
                   precision=lax.Precision.HIGHEST,
                   preferred_element_type=jnp.float32) * inv_e
    centered = h - mean
    var = jnp.dot(centered * centered, ones_col,
                  precision=lax.Precision.HIGHEST,
                  preferred_element_type=jnp.float32) * inv_e
    hn = centered * lax.rsqrt(var + LN_EPS)
    hn = hn * g_ref[...] + beta_ref[...]

    # ---- tanh ----
    y = jnp.tanh(hn)
    y_ref[...] = y.astype(y_ref.dtype)

    # ---- score_fc + sigmoid, lane-dense: logits = w2 @ y.T -> (1, tn) ----
    # (tiny extra MXU op; payoff is an unmasked lane-dense store for s)
    logits = lax.dot_general(
        w2_ref[...], y,
        dimension_numbers=(((1,), (1,)), ((), ())),
        precision=matmul_precision,
        preferred_element_type=jnp.float32,
    ) + b2_ref[0]
    s_ref[...] = jax.nn.sigmoid(logits).astype(s_ref.dtype)


def score_module_forward(x, w1, b1, gamma, beta, w2, b2, *,
                         row_tile=2048, y_dtype=jnp.float32,
                         mxu_precision=None):
    """
    x:     [N, dim_y_i]   float32
    w1:    [E, dim_y_i]   (PyTorch Linear weight layout)
    b1:    [E]
    gamma: [E], beta: [E] (LayerNorm affine)
    w2:    [1, E], b2: [1]
    y_dtype: dtype for the emitted y_i_ts (bf16 halves the dominant HBM stream;
             s_is is always computed from the f32 y inside the kernel).
    mxu_precision: precision for the Linear matmuls (None = TPU default; use
             lax.Precision.HIGHEST for strict f32 parity with PyTorch).
    returns (s_is [N, 1], y_i_ts [N, E])
    """
    N, D = x.shape
    E = w1.shape[0]

    # One-time wrapper-side parameter prep (tiny, off the hot path).
    w1_t = jnp.asarray(w1, jnp.float32).T           # (D, E): plain row-major contraction
    b1_2d = b1.reshape(1, E).astype(jnp.float32)
    g_2d = gamma.reshape(1, E).astype(jnp.float32)
    beta_2d = beta.reshape(1, E).astype(jnp.float32)
    w2_row = w2.reshape(1, E).astype(jnp.float32)
    b2_1d = b2.reshape(1).astype(jnp.float32)

    # Row tiling: one full-extent tile for small N; otherwise large tiles (multiple of
    # 128) that keep >= _MIN_GRID_STEPS grid steps for pipeline depth / megacore.
    if N <= row_tile:
        tn = N
    else:
        cap = max(128, _round_up(row_tile, 128))
        want = max(_MIN_TILE, _round_up(pl.cdiv(N, _MIN_GRID_STEPS), 128))
        tn = min(cap, want)
    grid = (pl.cdiv(N, tn),)

    kernel = functools.partial(_score_kernel, matmul_precision=mxu_precision)

    s_row, y_out = pl.pallas_call(
        kernel,
        out_shape=(
            jax.ShapeDtypeStruct((1, N), jnp.float32),   # s (lane-dense row)
            jax.ShapeDtypeStruct((N, E), y_dtype),       # y_i_ts
        ),
        grid_spec=pltpu.PrefetchScalarGridSpec(
            num_scalar_prefetch=0,
            grid=grid,
            in_specs=[
                pl.BlockSpec((tn, D), lambda i: (i, 0)),            # x (row-tiled)
                pl.BlockSpec((D, E), lambda i: (0, 0)),             # w1^T (resident)
                pl.BlockSpec((1, E), lambda i: (0, 0)),             # b1
                pl.BlockSpec((1, E), lambda i: (0, 0)),             # gamma
                pl.BlockSpec((1, E), lambda i: (0, 0)),             # beta
                pl.BlockSpec((1, E), lambda i: (0, 0)),             # w2 row
                pl.BlockSpec(memory_space=pltpu.MemorySpace.SMEM),  # b2 scalar
            ],
            out_specs=[
                pl.BlockSpec((1, tn), lambda i: (0, i)),            # s (lane-dense)
                pl.BlockSpec((tn, E), lambda i: (i, 0)),            # y_i_ts
            ],
        ),
        compiler_params=pltpu.CompilerParams(
            dimension_semantics=("parallel",),      # row tiles independent (v7x 2xTC)
            vmem_limit_bytes=32 * 1024 * 1024,      # headroom for big tiles on v5e
        ),
    )(x, w1_t, b1_2d, g_2d, beta_2d, w2_row, b2_1d)

    # (1, N) -> (N, 1): identical row-major memory layout, free reshape in the wrapper.
    return s_row.reshape(N, 1), y_out


def _reference(x, w1, b1, gamma, beta, w2, b2):
    h = x @ w1.T + b1
    mean = h.mean(axis=-1, keepdims=True)
    var = ((h - mean) ** 2).mean(axis=-1, keepdims=True)
    hn = (h - mean) / jnp.sqrt(var + LN_EPS) * gamma + beta
    y = jnp.tanh(hn)
    s = jax.nn.sigmoid(y @ w2.T + b2)
    return s, y


if __name__ == "__main__":
    key = jax.random.PRNGKey(0)
    N, dim_y_i, dim_embedding_wu = 8, 16, 32

    k_x, k_w1, k_b1, k_w2, k_b2 = jax.random.split(key, 5)
    x = jax.random.normal(k_x, (N, dim_y_i), dtype=jnp.float32)

    # Deterministic parameter init (synthetic; mimics Linear/LayerNorm shapes).
    w1 = jax.random.normal(k_w1, (dim_embedding_wu, dim_y_i),
                           dtype=jnp.float32) * 0.1
    b1 = jax.random.normal(k_b1, (dim_embedding_wu,), dtype=jnp.float32) * 0.1
    gamma = jnp.ones((dim_embedding_wu,), dtype=jnp.float32)   # LN default
    beta = jnp.zeros((dim_embedding_wu,), dtype=jnp.float32)   # LN default
    w2 = jax.random.normal(k_w2, (1, dim_embedding_wu),
                           dtype=jnp.float32) * 0.1
    b2 = jax.random.normal(k_b2, (1,), dtype=jnp.float32) * 0.1

    s_ref, y_ref = _reference(x, w1, b1, gamma, beta, w2, b2)

    # --- f32 path, tiny N (single full-extent tile) ---
    s_is, y_i_ts = score_module_forward(x, w1, b1, gamma, beta, w2, b2)
    jax.block_until_ready((s_is, y_i_ts))
    assert s_is.shape == (N, 1) and y_i_ts.shape == (N, dim_embedding_wu)
    assert jnp.allclose(s_is, s_ref, atol=2e-5, rtol=2e-5)
    assert jnp.allclose(y_i_ts, y_ref, atol=2e-5, rtol=2e-5)

    # --- bf16 y output (halves the dominant HBM stream); s stays f32-accurate ---
    s_bf, y_bf = score_module_forward(x, w1, b1, gamma, beta, w2, b2,
                                      y_dtype=jnp.bfloat16)
    jax.block_until_ready((s_bf, y_bf))
    assert y_bf.dtype == jnp.bfloat16
    assert jnp.allclose(s_bf, s_ref, atol=2e-5, rtol=2e-5)
    assert jnp.allclose(y_bf.astype(jnp.float32), y_ref, atol=2e-2, rtol=2e-2)

    # --- multi-tile path with a masked remainder tile (row_tile forced small) ---
    N2 = 1029  # -> 5 tiles of 256 rows, last tile masked
    x2 = jax.random.normal(jax.random.PRNGKey(1), (N2, dim_y_i),
                           dtype=jnp.float32)
    s2, y2 = score_module_forward(x2, w1, b1, gamma, beta, w2, b2, row_tile=256)
    jax.block_until_ready((s2, y2))
    s2_ref, y2_ref = _reference(x2, w1, b1, gamma, beta, w2, b2)
    assert s2.shape == (N2, 1) and y2.shape == (N2, dim_embedding_wu)
    assert jnp.allclose(s2, s2_ref, atol=2e-5, rtol=2e-5)
    assert jnp.allclose(y2, y2_ref, atol=2e-5, rtol=2e-5)

    print("KERNEL_OK")
</pallas_src>

<mosaic_0001>
module attributes {stable_mosaic.version = 11 : i64} {
  func.func @_score_kernel(%arg0: i32, %arg1: memref<8x16xf32, #tpu.memory_space<vmem>>, %arg2: memref<16x32xf32, #tpu.memory_space<vmem>>, %arg3: memref<1x32xf32, #tpu.memory_space<vmem>>, %arg4: memref<1x32xf32, #tpu.memory_space<vmem>>, %arg5: memref<1x32xf32, #tpu.memory_space<vmem>>, %arg6: memref<1x32xf32, #tpu.memory_space<vmem>>, %arg7: memref<1xf32, #tpu.memory_space<smem>>, %arg8: memref<1x8xf32, #tpu.memory_space<vmem>>, %arg9: memref<8x32xf32, #tpu.memory_space<vmem>>) attributes {dimension_semantics = [#tpu.dimension_semantics<parallel>], iteration_bounds = array<i64: 1>, scalar_prefetch = 0 : i64, scratch_operands = 0 : i64, tpu.core_type = #tpu.core_type<tc>, window_params = [{transform_indices = @transform_0, window_bounds = array<i64: 8, 16>}, {pipeline_mode = #tpu.pipeline_mode<synchronous>, transform_indices = @transform_1, window_bounds = array<i64: 16, 32>}, {pipeline_mode = #tpu.pipeline_mode<synchronous>, transform_indices = @transform_2, window_bounds = array<i64: 1, 32>}, {pipeline_mode = #tpu.pipeline_mode<synchronous>, transform_indices = @transform_3, window_bounds = array<i64: 1, 32>}, {pipeline_mode = #tpu.pipeline_mode<synchronous>, transform_indices = @transform_4, window_bounds = array<i64: 1, 32>}, {pipeline_mode = #tpu.pipeline_mode<synchronous>, transform_indices = @transform_5, window_bounds = array<i64: 1, 32>}, {transform_indices = @transform_6, window_bounds = array<i64: 1>}, {transform_indices = @transform_7, window_bounds = array<i64: 1, 8>}, {transform_indices = @transform_8, window_bounds = array<i64: 8, 32>}]} {
    %c0 = arith.constant 0 : index
    %c0_0 = arith.constant 0 : index
    %0 = vector.load %arg1[%c0, %c0_0] : memref<8x16xf32, #tpu.memory_space<vmem>>, vector<8x16xf32>
    %c0_1 = arith.constant 0 : index
    %c0_2 = arith.constant 0 : index
    %1 = vector.load %arg2[%c0_1, %c0_2] : memref<16x32xf32, #tpu.memory_space<vmem>>, vector<16x32xf32>
    %cst = arith.constant dense<0.000000e+00> : vector<8x32xf32>
    %2 = tpu.matmul %0, %1, %cst {dimension_numbers = #tpu.dot_dimension_numbers<[1], [0], [0], [1], [0, 0, 1, 1], [], []>} : vector<8x16xf32>, vector<16x32xf32>, vector<8x32xf32> -> vector<8x32xf32>
    %c0_3 = arith.constant 0 : index
    %c0_4 = arith.constant 0 : index
    %3 = vector.load %arg3[%c0_3, %c0_4] : memref<1x32xf32, #tpu.memory_space<vmem>>, vector<1x32xf32>
    %4 = vector.broadcast %3 : vector<1x32xf32> to vector<8x32xf32>
    %5 = arith.addf %2, %4 : vector<8x32xf32>
    %cst_5 = arith.constant 1.000000e+00 : f32
    %6 = vector.broadcast %cst_5 : f32 to vector<32x1xf32>
    %cst_6 = arith.constant dense<0.000000e+00> : vector<8x1xf32>
    %7 = tpu.matmul %5, %6, %cst_6 {dimension_numbers = #tpu.dot_dimension_numbers<[1], [0], [0], [1], [0, 0, 1, 1], [], []>, precision = #tpu.contract_precision<fp32>} : vector<8x32xf32>, vector<32x1xf32>, vector<8x1xf32> -> vector<8x1xf32>
    %cst_7 = arith.constant 3.125000e-02 : f32
    %8 = vector.broadcast %cst_7 : f32 to vector<8x1xf32>
    %9 = arith.mulf %7, %8 : vector<8x1xf32>
    %10 = vector.broadcast %9 : vector<8x1xf32> to vector<8x32xf32>
    %11 = arith.subf %5, %10 : vector<8x32xf32>
    %12 = arith.mulf %11, %11 : vector<8x32xf32>
    %cst_8 = arith.constant dense<0.000000e+00> : vector<8x1xf32>
    %13 = tpu.matmul %12, %6, %cst_8 {dimension_numbers = #tpu.dot_dimension_numbers<[1], [0], [0], [1], [0, 0, 1, 1], [], []>, precision = #tpu.contract_precision<fp32>} : vector<8x32xf32>, vector<32x1xf32>, vector<8x1xf32> -> vector<8x1xf32>
    %cst_9 = arith.constant 3.125000e-02 : f32
    %14 = vector.broadcast %cst_9 : f32 to vector<8x1xf32>
    %15 = arith.mulf %13, %14 : vector<8x1xf32>
    %cst_10 = arith.constant 9.99999974E-6 : f32
    %16 = vector.broadcast %cst_10 : f32 to vector<8x1xf32>
    %17 = arith.addf %15, %16 : vector<8x1xf32>
    %18 = math.rsqrt %17 : vector<8x1xf32>
    %19 = vector.broadcast %18 : vector<8x1xf32> to vector<8x32xf32>
    %20 = arith.mulf %11, %19 : vector<8x32xf32>
    %c0_11 = arith.constant 0 : index
    %c0_12 = arith.constant 0 : index
    %21 = vector.load %arg4[%c0_11, %c0_12] : memref<1x32xf32, #tpu.memory_space<vmem>>, vector<1x32xf32>
    %22 = vector.broadcast %21 : vector<1x32xf32> to vector<8x32xf32>
    %23 = arith.mulf %20, %22 : vector<8x32xf32>
    %c0_13 = arith.constant 0 : index
    %c0_14 = arith.constant 0 : index
    %24 = vector.load %arg5[%c0_13, %c0_14] : memref<1x32xf32, #tpu.memory_space<vmem>>, vector<1x32xf32>
    %25 = vector.broadcast %24 : vector<1x32xf32> to vector<8x32xf32>
    %26 = arith.addf %23, %25 : vector<8x32xf32>
    %27 = math.tanh %26 : vector<8x32xf32>
    %c0_15 = arith.constant 0 : index
    %c0_16 = arith.constant 0 : index
    %28 = vector.load %arg9[%c0_15, %c0_16] : memref<8x32xf32, #tpu.memory_space<vmem>>, vector<8x32xf32>
    tpu.vector_store %arg9[%c0_15, %c0_16], %27 {strides = array<i32>} : memref<8x32xf32, #tpu.memory_space<vmem>>, vector<8x32xf32>,
    %c0_17 = arith.constant 0 : index
    %c0_18 = arith.constant 0 : index
    %29 = vector.load %arg6[%c0_17, %c0_18] : memref<1x32xf32, #tpu.memory_space<vmem>>, vector<1x32xf32>
    %cst_19 = arith.constant dense<0.000000e+00> : vector<1x8xf32>
    %30 = tpu.matmul %29, %27, %cst_19 {dimension_numbers = #tpu.dot_dimension_numbers<[1], [1], [0], [0], [0, 0, 1, 0], [], []>} : vector<1x32xf32>, vector<8x32xf32>, vector<1x8xf32> -> vector<1x8xf32>
    %c0_20 = arith.constant 0 : index
    %31 = memref.load %arg7[%c0_20] : memref<1xf32, #tpu.memory_space<smem>>
    %32 = vector.broadcast %31 : f32 to vector<1x8xf32>
    %33 = arith.addf %30, %32 : vector<1x8xf32>
    %34 = arith.negf %33 : vector<1x8xf32>
    %35 = math.exp %34 : vector<1x8xf32>
    %cst_21 = arith.constant 1.000000e+00 : f32
    %36 = vector.broadcast %cst_21 : f32 to vector<1x8xf32>
    %37 = arith.addf %36, %35 : vector<1x8xf32>
    %38 = arith.divf %36, %37 : vector<1x8xf32>
    %c0_22 = arith.constant 0 : index
    %c0_23 = arith.constant 0 : index
    %39 = vector.load %arg8[%c0_22, %c0_23] : memref<1x8xf32, #tpu.memory_space<vmem>>, vector<1x8xf32>
    tpu.vector_store %arg8[%c0_22, %c0_23], %38 {strides = array<i32>} : memref<1x8xf32, #tpu.memory_space<vmem>>, vector<1x8xf32>,
    return
  }
  func.func @transform_0(%arg0: i32) -> (i32, i32) {
    %c0_i32 = arith.constant 0 : i32
    %c0_i32_0 = arith.constant 0 : i32
    return %arg0, %c0_i32 : i32, i32
  }
  func.func @transform_1(%arg0: i32) -> (i32, i32) {
    %c0_i32 = arith.constant 0 : i32
    %c0_i32_0 = arith.constant 0 : i32
    %c0_i32_1 = arith.constant 0 : i32
    return %c0_i32, %c0_i32_0 : i32, i32
  }
  func.func @transform_2(%arg0: i32) -> (i32, i32) {
    %c0_i32 = arith.constant 0 : i32
    %c0_i32_0 = arith.constant 0 : i32
    %c0_i32_1 = arith.constant 0 : i32
    return %c0_i32, %c0_i32_0 : i32, i32
  }
  func.func @transform_3(%arg0: i32) -> (i32, i32) {
    %c0_i32 = arith.constant 0 : i32
    %c0_i32_0 = arith.constant 0 : i32
    %c0_i32_1 = arith.constant 0 : i32
    return %c0_i32, %c0_i32_0 : i32, i32
  }
  func.func @transform_4(%arg0: i32) -> (i32, i32) {
    %c0_i32 = arith.constant 0 : i32
    %c0_i32_0 = arith.constant 0 : i32
    %c0_i32_1 = arith.constant 0 : i32
    return %c0_i32, %c0_i32_0 : i32, i32
  }
  func.func @transform_5(%arg0: i32) -> (i32, i32) {
    %c0_i32 = arith.constant 0 : i32
    %c0_i32_0 = arith.constant 0 : i32
    %c0_i32_1 = arith.constant 0 : i32
    return %c0_i32, %c0_i32_0 : i32, i32
  }
  func.func @transform_6(%arg0: i32) -> i32 {
    %c0_i32 = arith.constant 0 : i32
    %c0_i32_0 = arith.constant 0 : i32
    return %c0_i32 : i32
  }
  func.func @transform_7(%arg0: i32) -> (i32, i32) {
    %c0_i32 = arith.constant 0 : i32
    %c0_i32_0 = arith.constant 0 : i32
    return %c0_i32, %arg0 : i32, i32
  }
  func.func @transform_8(%arg0: i32) -> (i32, i32) {
    %c0_i32 = arith.constant 0 : i32
    %c0_i32_0 = arith.constant 0 : i32
    return %arg0, %c0_i32 : i32, i32
  }
}

</mosaic_0001>

<llo_original>
// kernel: tpu_custom_call.1
$region0: #{tpu_custom_call.1}
  #allocation0 [shape = 'u32[]', space=smem, size = 0x4, offset = 0x4, fixed_abs, tag = 'smem constant byte address 0x4 - core index']
  #allocation1 [shape = 'u32[144,128]{1,0:T(1,128)}', space=vmem, size = 0x12000, scoped, tag = 'internal scratch']
  #allocation2 [shape = 'f32[1]{0:T(128)S(6)}', space=smem, size = 0x200, scoped, tag = 'scoped memory for tpu_custom_call.1']
  %s0 = inlined_call_operand.hbm [shape: f32[8,16], index: 0, kind: input, shape index: {}]
  %s1 = inlined_call_operand.hbm [shape: f32[16,32], index: 1, kind: input, shape index: {}]
  %s2 = inlined_call_operand.vmem [shape: f32[1,32], index: 2, kind: input, shape index: {}]
  %s3 = inlined_call_operand.vmem [shape: f32[1,32], index: 3, kind: input, shape index: {}]
  %s4 = inlined_call_operand.vmem [shape: f32[1,32], index: 4, kind: input, shape index: {}]
  %s5 = inlined_call_operand.vmem [shape: f32[1,32], index: 5, kind: input, shape index: {}]
  %s6 = inlined_call_operand.<no memory space> [shape: f32[1], index: 6, kind: input, shape index: {}]
  %s7 = inlined_call_operand.hbm [shape: f32[1,8], index: 7, kind: output, shape index: {0}]
  %s8 = inlined_call_operand.hbm [shape: f32[8,32], index: 8, kind: output, shape index: {1}]
  %9 = xla_tuple %s7, %s8
  %s10 = sld [smem:[#allocation0]]
  $region54: #{tpu_custom_call.1} parent=0
    _
  %s12 = ssub.s32 1, %s10
  %s13 = scalar_select 0, %s12, %s10
  %14 = sst [smem:[#allocation2]] %s6
  $region1: #{tpu_custom_call.1} parent=0
    #allocation3 [shape = 'u8[4096]{0}', space=vmem, size = 0x1000, scoped, tag = 'input window, operand 0, single buffered']
    #allocation4 [shape = 's32[1]{0}', space=sflag, size = 0x4, scoped, tag = 'scoped memory for tpu_custom_call.1']
    #allocation5 [shape = 's32[1]{0}', space=sflag, size = 0x4, scoped, tag = 'scoped memory for tpu_custom_call.1']
    #allocation6 [shape = 'u8[8192]{0}', space=vmem, size = 0x2000, scoped, tag = 'input window, operand 1, single buffered']
    #allocation7 [shape = 's32[1]{0}', space=sflag, size = 0x4, scoped, tag = 'scoped memory for tpu_custom_call.1']
    #allocation8 [shape = 'u8[512]{0}', space=vmem, size = 0x400, scoped, tag = 'output window, operand 0, single buffered']
    #allocation9 [shape = 'u8[4096]{0}', space=vmem, size = 0x1000, scoped, tag = 'output window, operand 1, single buffered']
    #allocation10 [shape = 's32[1]{0}', space=sflag, size = 0x4, scoped, tag = 'scoped memory for tpu_custom_call.1']
    %15 = vsyncpa [#allocation4], 0
    %16 = vsyncpa [#allocation7], 0
    %17 = vsyncpa [#allocation5], 0
    %18 = vsyncpa [#allocation10], 0
    // Predicated region
    $region2: #{tpu_custom_call.1} parent=1 // pred_check
      _
    $region3: #{tpu_custom_call.1} parent=1 // pred_check_branch
      %20 = sbr.rel (0) target = $region5
    $region4: #{tpu_custom_call.1} parent=1 // pred_region
      %s22 = ssub.s32 128, 128
      %23 = vsyncadd [#allocation4], %s22
      %s25 = sshll.u32 [#allocation3], 4
      %s26 = int_to_ptr.vmem [resolvable:$true] %s25
      %28 = dma.hbm_to_vmem [thread:$0]  %s0, 128, %s26, [#allocation4]
    $region5: #{tpu_custom_call.1} parent=1 // pred_fallthru
      _
    // Predicated region
    $region6: #{tpu_custom_call.1} parent=1 // pred_check
      _
    $region7: #{tpu_custom_call.1} parent=1 // pred_check_branch
      %30 = sbr.rel (0) target = $region9
    $region8: #{tpu_custom_call.1} parent=1 // pred_region
      %s32 = ssub.s32 256, 256
      %33 = vsyncadd [#allocation7], %s32
      %s34 = sshll.u32 [#allocation6], 4
      %s35 = int_to_ptr.vmem [resolvable:$true] %s34
      %40 = dma.hbm_to_vmem [thread:$0]  %s1, 256, %s35, [#allocation7], 128, 128, 8
    $region9: #{tpu_custom_call.1} parent=1 // pred_fallthru
      _
    // Predicated region
    $region10: #{tpu_custom_call.1} parent=1 // pred_check
      _
    $region11: #{tpu_custom_call.1} parent=1 // pred_check_branch
      %42 = sbr.rel (0) target = $region13
    $region12: #{tpu_custom_call.1} parent=1 // pred_region
      _
    $region13: #{tpu_custom_call.1} parent=1 // pred_fallthru
      _
    // Predicated region
    $region14: #{tpu_custom_call.1} parent=1 // pred_check
      _
    $region15: #{tpu_custom_call.1} parent=1 // pred_check_branch
      %44 = sbr.rel (0) target = $region17
    $region16: #{tpu_custom_call.1} parent=1 // pred_region
      _
    $region17: #{tpu_custom_call.1} parent=1 // pred_fallthru
      _
    // Predicated region
    $region18: #{tpu_custom_call.1} parent=1 // pred_check
      _
    $region19: #{tpu_custom_call.1} parent=1 // pred_check_branch
      %46 = sbr.rel (0) target = $region21
    $region20: #{tpu_custom_call.1} parent=1 // pred_region
      _
    $region21: #{tpu_custom_call.1} parent=1 // pred_fallthru
      _
    // Predicated region
    $region22: #{tpu_custom_call.1} parent=1 // pred_check
      _
    $region23: #{tpu_custom_call.1} parent=1 // pred_check_branch
      %48 = sbr.rel (0) target = $region25
    $region24: #{tpu_custom_call.1} parent=1 // pred_region
      _
    $region25: #{tpu_custom_call.1} parent=1 // pred_fallthru
      _
    // Predicated region
    $region26: #{tpu_custom_call.1} parent=1 // pred_check
      _
    $region27: #{tpu_custom_call.1} parent=1 // pred_check_branch
      %50 = sbr.rel (0) target = $region29
    $region28: #{tpu_custom_call.1} parent=1 // pred_region
      _
    $region29: #{tpu_custom_call.1} parent=1 // pred_fallthru
      _
    // Predicated region
    $region30: #{tpu_custom_call.1} parent=1 // pred_check
      _
    $region31: #{tpu_custom_call.1} parent=1 // pred_check_branch
      %52 = sbr.rel (0) target = $region33
    $region32: #{tpu_custom_call.1} parent=1 // pred_region
      %53 = dma.done [#allocation4], 128
    $region33: #{tpu_custom_call.1} parent=1 // pred_fallthru
      _
    // Predicated region
    $region34: #{tpu_custom_call.1} parent=1 // pred_check
      _
    $region35: #{tpu_custom_call.1} parent=1 // pred_check_branch
      %55 = sbr.rel (0) target = $region37
    $region36: #{tpu_custom_call.1} parent=1 // pred_region
      %56 = dma.done [#allocation7], 256
    $region37: #{tpu_custom_call.1} parent=1 // pred_fallthru
      _
    %v57 = vld [vmem:[#allocation3] sm:$0xff]
    %v58 = vld [vmem:[#allocation6] sm:$0xff]
    %v59 = vld [vmem:[#allocation6 + $0x8] sm:$0xff]
    %v60 = vld [vmem:[%s2] sm:$0x1]
    %v62 = vlaneseq
    %v63 = vshrl.u32 %v62, 7
    %v64 = vsub.s32 0, %v63
    %v65 = vrot.slane %v60, %v64
    %vm67 = vcmask 130048
    %v69 = vsel %vm67, %v57, 0
    %71 = vmatprep.subr.mxu0 0.0
    %72 = vmatpush1.msra.mxu0 %v58
    %73 = vmatprep.subr.mxu0 0.0
    %74 = vmatpush1.msra.mxu0 %v59
    %75 = vmatprep.subr.mxu0 0.0
    %76 = vmatpush1.msra.mxu0 0.0
    %77 = vmatprep.subr.mxu0 0.0
    %78 = vmatpush1.msra.mxu0 0.0
    %79 = vmatprep.subr.mxu0 0.0
    %80 = vmatpush1.msra.mxu0 0.0
    %81 = vmatprep.subr.mxu0 0.0
    %82 = vmatpush1.msra.mxu0 0.0
    %83 = vmatprep.subr.mxu0 0.0
    %84 = vmatpush1.msra.mxu0 0.0
    %85 = vmatprep.subr.mxu0 0.0
    %86 = vmatpush1.msra.mxu0 0.0
    %87 = vmatprep.subr.mxu0 0.0
    %88 = vmatpush1.msra.mxu0 0.0
    %89 = vmatprep.subr.mxu0 0.0
    %90 = vmatpush1.msra.mxu0 0.0
    %91 = vmatprep.subr.mxu0 0.0
    %92 = vmatpush1.msra.mxu0 0.0
    %93 = vmatprep.subr.mxu0 0.0
    %94 = vmatpush1.msra.mxu0 0.0
    %95 = vmatprep.subr.mxu0 0.0
    %96 = vmatpush1.msra.mxu0 0.0
    %97 = vmatprep.subr.mxu0 0.0
    %98 = vmatpush1.msra.mxu0 0.0
    %99 = vmatprep.subr.mxu0 0.0
    %100 = vmatpush1.msra.mxu0 0.0
    %101 = vmatprep.subr.mxu0 0.0
    %102 = vmatpush1.msra.mxu0 0.0
    %103 = vmatprep.subr.mxu0 0.0
    %104 = vmatpush1.msra.mxu0 0.0
    %105 = vmatprep.subr.mxu0 0.0
    %106 = vmatpush1.msra.mxu0 0.0
    %107 = vmatprep.subr.mxu0 0.0
    %108 = vmatpush1.msra.mxu0 0.0
    %109 = vmatprep.subr.mxu0 0.0
    %110 = vmatpush1.msra.mxu0 0.0
    %111 = vmatprep.subr.mxu0 0.0
    %112 = vmatpush1.msra.mxu0 0.0
    %113 = vmatprep.subr.mxu0 0.0
    %114 = vmatpush1.msra.mxu0 0.0
    %115 = vmatprep.subr.mxu0 0.0
    %116 = vmatpush1.msra.mxu0 0.0
    %117 = vmatprep.subr.mxu0 0.0
    %118 = vmatpush1.msra.mxu0 0.0
    %119 = vmatprep.subr.mxu0 0.0
    %120 = vmatpush1.msra.mxu0 0.0
    %121 = vmatprep.subr.mxu0 0.0
    %122 = vmatpush1.msra.mxu0 0.0
    %123 = vmatprep.subr.mxu0 0.0
    %124 = vmatpush1.msra.mxu0 0.0
    %125 = vmatprep.subr.mxu0 0.0
    %126 = vmatpush1.msra.mxu0 0.0
    %127 = vmatprep.subr.mxu0 0.0
    %128 = vmatpush1.msra.mxu0 0.0
    %129 = vmatprep.subr.mxu0 0.0
    %130 = vmatpush1.msra.mxu0 0.0
    %131 = vmatprep.subr.mxu0 0.0
    %132 = vmatpush1.msra.mxu0 0.0
    %133 = vmatprep.subr.mxu0 0.0
    %134 = vmatpush1.msra.mxu0 0.0
    %135 = vmatprep.mubr.f32.mxu0 0.0
    %136 = vmatmul.mubr.f32.gmra.mrb[0].mxu0 %v69
    %v137 = vpop.f32.mrb[0].mxu0
    %v138 = vadd.f32 %v65, %v137
    %v139 = vpop.f32.mrb[0].mxu0
    %140 = vdwg.mxu0
    %vm141 = vcmask 261120
    %v143 = vsel %vm141, %v138, 0
    %145 = vmatprep.subr.mxu0 0.0
    %146 = vmatpush1.msra.mxu0 1.0
    %147 = vmatprep.subr.mxu0 0.0
    %148 = vmatpush1.msra.mxu0 1.0
    %149 = vmatprep.subr.mxu0 0.0
    %150 = vmatpush1.msra.mxu0 1.0
    %151 = vmatprep.subr.mxu0 0.0
    %152 = vmatpush1.msra.mxu0 1.0
    %153 = vmatprep.subr.mxu0 0.0
    %154 = vmatpush1.msra.mxu0 0.0
    %155 = vmatprep.subr.mxu0 0.0
    %156 = vmatpush1.msra.mxu0 0.0
    %157 = vmatprep.subr.mxu0 0.0
    %158 = vmatpush1.msra.mxu0 0.0
    %159 = vmatprep.subr.mxu0 0.0
    %160 = vmatpush1.msra.mxu0 0.0
    %161 = vmatprep.subr.mxu0 0.0
    %162 = vmatpush1.msra.mxu0 0.0
    %163 = vmatprep.subr.mxu0 0.0
    %164 = vmatpush1.msra.mxu0 0.0
    %165 = vmatprep.subr.mxu0 0.0
    %166 = vmatpush1.msra.mxu0 0.0
    %167 = vmatprep.subr.mxu0 0.0
    %168 = vmatpush1.msra.mxu0 0.0
    %169 = vmatprep.subr.mxu0 0.0
    %170 = vmatpush1.msra.mxu0 0.0
    %171 = vmatprep.subr.mxu0 0.0
    %172 = vmatpush1.msra.mxu0 0.0
    %173 = vmatprep.subr.mxu0 0.0
    %174 = vmatpush1.msra.mxu0 0.0
    %175 = vmatprep.subr.mxu0 0.0
    %176 = vmatpush1.msra.mxu0 0.0
    %177 = vmatprep.subr.mxu0 0.0
    %178 = vmatpush1.msra.mxu0 0.0
    %179 = vmatprep.subr.mxu0 0.0
    %180 = vmatpush1.msra.mxu0 0.0
    %181 = vmatprep.subr.mxu0 0.0
    %182 = vmatpush1.msra.mxu0 0.0
    %183 = vmatprep.subr.mxu0 0.0
    %184 = vmatpush1.msra.mxu0 0.0
    %185 = vmatprep.subr.mxu0 0.0
    %186 = vmatpush1.msra.mxu0 0.0
    %187 = vmatprep.subr.mxu0 0.0
    %188 = vmatpush1.msra.mxu0 0.0
    %189 = vmatprep.subr.mxu0 0.0
    %190 = vmatpush1.msra.mxu0 0.0
    %191 = vmatprep.subr.mxu0 0.0
    %192 = vmatpush1.msra.mxu0 0.0
    %193 = vmatprep.subr.mxu0 0.0
    %194 = vmatpush1.msra.mxu0 0.0
    %195 = vmatprep.subr.mxu0 0.0
    %196 = vmatpush1.msra.mxu0 0.0
    %197 = vmatprep.subr.mxu0 0.0
    %198 = vmatpush1.msra.mxu0 0.0
    %199 = vmatprep.subr.mxu0 0.0
    %200 = vmatpush1.msra.mxu0 0.0
    %201 = vmatprep.subr.mxu0 0.0
    %202 = vmatpush1.msra.mxu0 0.0
    %203 = vmatprep.subr.mxu0 0.0
    %204 = vmatpush1.msra.mxu0 0.0
    %205 = vmatprep.subr.mxu0 0.0
    %206 = vmatpush1.msra.mxu0 0.0
    %207 = vmatprep.subr.mxu0 0.0
    %208 = vmatpush1.msra.mxu0 0.0
    %209 = vmatprep.mubr.f32.mxu0 0.0
    %v210 = vand.u32 %v143, 4294901760
    %v211 = vsub.f32 %v143, %v210
    %v212 = vand.u32 %v211, 4294901760
    %v213 = vsub.f32 %v211, %v212
    %v214 = vand.u32 %v213, 4294901760
    %215 = vmatmul.mubr.f32.gmra.mrb[0].mxu0 %v214
    %v216 = vpop.f32.mrb[0].mxu0
    %v217 = vadd.f32 0.0, %v216
    %v218 = vpop.f32.mrb[0].mxu0
    %219 = vdwg.mxu0
    %220 = vmatprep.subr.mxu0 0.0
    %221 = vmatpush1.msra.mxu0 0.0
    %222 = vmatprep.subr.mxu0 0.0
    %223 = vmatpush1.msra.mxu0 0.0
    %224 = vmatprep.subr.mxu0 0.0
    %225 = vmatpush1.msra.mxu0 0.0
    %226 = vmatprep.subr.mxu0 0.0
    %227 = vmatpush1.msra.mxu0 0.0
    %228 = vmatprep.subr.mxu0 0.0
    %229 = vmatpush1.msra.mxu0 0.0
    %230 = vmatprep.subr.mxu0 0.0
    %231 = vmatpush1.msra.mxu0 0.0
    %232 = vmatprep.subr.mxu0 0.0
    %233 = vmatpush1.msra.mxu0 0.0
    %234 = vmatprep.subr.mxu0 0.0
    %235 = vmatpush1.msra.mxu0 0.0
    %236 = vmatprep.subr.mxu0 0.0
    %237 = vmatpush1.msra.mxu0 0.0
    %238 = vmatprep.subr.mxu0 0.0
    %239 = vmatpush1.msra.mxu0 0.0
    %240 = vmatprep.subr.mxu0 0.0
    %241 = vmatpush1.msra.mxu0 0.0
    %242 = vmatprep.subr.mxu0 0.0
    %243 = vmatpush1.msra.mxu0 0.0
    %244 = vmatprep.subr.mxu0 0.0
    %245 = vmatpush1.msra.mxu0 0.0
    %246 = vmatprep.subr.mxu0 0.0
    %247 = vmatpush1.msra.mxu0 0.0
    %248 = vmatprep.subr.mxu0 0.0
    %249 = vmatpush1.msra.mxu0 0.0
    %250 = vmatprep.subr.mxu0 0.0
    %251 = vmatpush1.msra.mxu0 0.0
    %252 = vmatprep.subr.mxu0 0.0
    %253 = vmatpush1.msra.mxu0 0.0
    %254 = vmatprep.subr.mxu0 0.0
    %255 = vmatpush1.msra.mxu0 0.0
    %256 = vmatprep.subr.mxu0 0.0
    %257 = vmatpush1.msra.mxu0 0.0
    %258 = vmatprep.subr.mxu0 0.0
    %259 = vmatpush1.msra.mxu0 0.0
    %260 = vmatprep.subr.mxu0 0.0
    %261 = vmatpush1.msra.mxu0 0.0
    %262 = vmatprep.subr.mxu0 0.0
    %263 = vmatpush1.msra.mxu0 0.0
    %264 = vmatprep.subr.mxu0 0.0
    %265 = vmatpush1.msra.mxu0 0.0
    %266 = vmatprep.subr.mxu0 0.0
    %267 = vmatpush1.msra.mxu0 0.0
    %268 = vmatprep.subr.mxu0 0.0
    %269 = vmatpush1.msra.mxu0 0.0
    %270 = vmatprep.subr.mxu0 0.0
    %271 = vmatpush1.msra.mxu0 0.0
    %272 = vmatprep.subr.mxu0 0.0
    %273 = vmatpush1.msra.mxu0 0.0
    %274 = vmatprep.subr.mxu0 0.0
    %275 = vmatpush1.msra.mxu0 0.0
    %276 = vmatprep.subr.mxu0 0.0
    %277 = vmatpush1.msra.mxu0 0.0
    %278 = vmatprep.subr.mxu0 0.0
    %279 = vmatpush1.msra.mxu0 0.0
    %280 = vmatprep.subr.mxu0 0.0
    %281 = vmatpush1.msra.mxu0 0.0
    %282 = vmatprep.subr.mxu0 0.0
    %283 = vmatpush1.msra.mxu0 0.0
    %284 = vmatprep.mubr.f32.mxu0 0.0
    %v285 = vand.u32 %v143, 4294901760
    %286 = vmatmul.mubr.f32.gmra.mrb[0].mxu0 %v285
    %v287 = vpop.f32.mrb[0].mxu0
    %v288 = vadd.f32 %v217, %v287
    %v289 = vpop.f32.mrb[0].mxu0
    %290 = vdwg.mxu0
    %291 = vmatprep.subr.mxu0 0.0
    %292 = vmatpush1.msra.mxu0 0.0
    %293 = vmatprep.subr.mxu0 0.0
    %294 = vmatpush1.msra.mxu0 0.0
    %295 = vmatprep.subr.mxu0 0.0
    %296 = vmatpush1.msra.mxu0 0.0
    %297 = vmatprep.subr.mxu0 0.0
    %298 = vmatpush1.msra.mxu0 0.0
    %299 = vmatprep.subr.mxu0 0.0
    %300 = vmatpush1.msra.mxu0 0.0
    %301 = vmatprep.subr.mxu0 0.0
    %302 = vmatpush1.msra.mxu0 0.0
    %303 = vmatprep.subr.mxu0 0.0
    %304 = vmatpush1.msra.mxu0 0.0
    %305 = vmatprep.subr.mxu0 0.0
    %306 = vmatpush1.msra.mxu0 0.0
    %307 = vmatprep.subr.mxu0 0.0
    %308 = vmatpush1.msra.mxu0 0.0
    %309 = vmatprep.subr.mxu0 0.0
    %310 = vmatpush1.msra.mxu0 0.0
    %311 = vmatprep.subr.mxu0 0.0
    %312 = vmatpush1.msra.mxu0 0.0
    %313 = vmatprep.subr.mxu0 0.0
    %314 = vmatpush1.msra.mxu0 0.0
    %315 = vmatprep.subr.mxu0 0.0
    %316 = vmatpush1.msra.mxu0 0.0
    %317 = vmatprep.subr.mxu0 0.0
    %318 = vmatpush1.msra.mxu0 0.0
    %319 = vmatprep.subr.mxu0 0.0
    %320 = vmatpush1.msra.mxu0 0.0
    %321 = vmatprep.subr.mxu0 0.0
    %322 = vmatpush1.msra.mxu0 0.0
    %323 = vmatprep.subr.mxu0 0.0
    %324 = vmatpush1.msra.mxu0 0.0
    %325 = vmatprep.subr.mxu0 0.0
    %326 = vmatpush1.msra.mxu0 0.0
    %327 = vmatprep.subr.mxu0 0.0
    %328 = vmatpush1.msra.mxu0 0.0
    %329 = vmatprep.subr.mxu0 0.0
    %330 = vmatpush1.msra.mxu0 0.0
    %331 = vmatprep.subr.mxu0 0.0
    %332 = vmatpush1.msra.mxu0 0.0
    %333 = vmatprep.subr.mxu0 0.0
    %334 = vmatpush1.msra.mxu0 0.0
    %335 = vmatprep.subr.mxu0 0.0
    %336 = vmatpush1.msra.mxu0 0.0
    %337 = vmatprep.subr.mxu0 0.0
    %338 = vmatpush1.msra.mxu0 0.0
    %339 = vmatprep.subr.mxu0 0.0
    %340 = vmatpush1.msra.mxu0 0.0
    %341 = vmatprep.subr.mxu0 0.0
    %342 = vmatpush1.msra.mxu0 0.0
    %343 = vmatprep.subr.mxu0 0.0
    %344 = vmatpush1.msra.mxu0 0.0
    %345 = vmatprep.subr.mxu0 0.0
    %346 = vmatpush1.msra.mxu0 0.0
    %347 = vmatprep.subr.mxu0 0.0
    %348 = vmatpush1.msra.mxu0 0.0
    %349 = vmatprep.subr.mxu0 0.0
    %350 = vmatpush1.msra.mxu0 0.0
    %351 = vmatprep.subr.mxu0 0.0
    %352 = vmatpush1.msra.mxu0 0.0
    %353 = vmatprep.subr.mxu0 0.0
    %354 = vmatpush1.msra.mxu0 0.0
    %355 = vmatprep.mubr.f32.mxu0 0.0
    %v356 = vand.u32 %v143, 4294901760
    %v357 = vsub.f32 %v143, %v356
    %358 = vmatmul.mubr.f32.gmra.mrb[0].mxu0 %v357
    %v359 = vpop.f32.mrb[0].mxu0
    %v360 = vadd.f32 %v288, %v359
    %v361 = vpop.f32.mrb[0].mxu0
    %362 = vdwg.mxu0
    %363 = vmatprep.subr.mxu0 0.0
    %364 = vmatpush1.msra.mxu0 1.0
    %365 = vmatprep.subr.mxu0 0.0
    %366 = vmatpush1.msra.mxu0 1.0
    %367 = vmatprep.subr.mxu0 0.0
    %368 = vmatpush1.msra.mxu0 1.0
    %369 = vmatprep.subr.mxu0 0.0
    %370 = vmatpush1.msra.mxu0 1.0
    %371 = vmatprep.subr.mxu0 0.0
    %372 = vmatpush1.msra.mxu0 0.0
    %373 = vmatprep.subr.mxu0 0.0
    %374 = vmatpush1.msra.mxu0 0.0
    %375 = vmatprep.subr.mxu0 0.0
    %376 = vmatpush1.msra.mxu0 0.0
    %377 = vmatprep.subr.mxu0 0.0
    %378 = vmatpush1.msra.mxu0 0.0
    %379 = vmatprep.subr.mxu0 0.0
    %380 = vmatpush1.msra.mxu0 0.0
    %381 = vmatprep.subr.mxu0 0.0
    %382 = vmatpush1.msra.mxu0 0.0
    %383 = vmatprep.subr.mxu0 0.0
    %384 = vmatpush1.msra.mxu0 0.0
    %385 = vmatprep.subr.mxu0 0.0
    %386 = vmatpush1.msra.mxu0 0.0
    %387 = vmatprep.subr.mxu0 0.0
    %388 = vmatpush1.msra.mxu0 0.0
    %389 = vmatprep.subr.mxu0 0.0
    %390 = vmatpush1.msra.mxu0 0.0
    %391 = vmatprep.subr.mxu0 0.0
    %392 = vmatpush1.msra.mxu0 0.0
    %393 = vmatprep.subr.mxu0 0.0
    %394 = vmatpush1.msra.mxu0 0.0
    %395 = vmatprep.subr.mxu0 0.0
    %396 = vmatpush1.msra.mxu0 0.0
    %397 = vmatprep.subr.mxu0 0.0
    %398 = vmatpush1.msra.mxu0 0.0
    %399 = vmatprep.subr.mxu0 0.0
    %400 = vmatpush1.msra.mxu0 0.0
    %401 = vmatprep.subr.mxu0 0.0
    %402 = vmatpush1.msra.mxu0 0.0
    %403 = vmatprep.subr.mxu0 0.0
    %404 = vmatpush1.msra.mxu0 0.0
    %405 = vmatprep.subr.mxu0 0.0
    %406 = vmatpush1.msra.mxu0 0.0
    %407 = vmatprep.subr.mxu0 0.0
    %408 = vmatpush1.msra.mxu0 0.0
    %409 = vmatprep.subr.mxu0 0.0
    %410 = vmatpush1.msra.mxu0 0.0
    %411 = vmatprep.subr.mxu0 0.0
    %412 = vmatpush1.msra.mxu0 0.0
    %413 = vmatprep.subr.mxu0 0.0
    %414 = vmatpush1.msra.mxu0 0.0
    %415 = vmatprep.subr.mxu0 0.0
    %416 = vmatpush1.msra.mxu0 0.0
    %417 = vmatprep.subr.mxu0 0.0
    %418 = vmatpush1.msra.mxu0 0.0
    %419 = vmatprep.subr.mxu0 0.0
    %420 = vmatpush1.msra.mxu0 0.0
    %421 = vmatprep.subr.mxu0 0.0
    %422 = vmatpush1.msra.mxu0 0.0
    %423 = vmatprep.subr.mxu0 0.0
    %424 = vmatpush1.msra.mxu0 0.0
    %425 = vmatprep.subr.mxu0 0.0
    %426 = vmatpush1.msra.mxu0 0.0
    %427 = vmatprep.mubr.f32.mxu0 0.0
    %v428 = vand.u32 %v143, 4294901760
    %v429 = vsub.f32 %v143, %v428
    %v430 = vand.u32 %v429, 4294901760
    %431 = vmatmul.mubr.f32.gmra.mrb[0].mxu0 %v430
    %v432 = vpop.f32.mrb[0].mxu0
    %v433 = vadd.f32 %v360, %v432
    %v434 = vpop.f32.mrb[0].mxu0
    %435 = vdwg.mxu0
    %436 = vmatprep.subr.mxu0 0.0
    %437 = vmatpush1.msra.mxu0 0.0
    %438 = vmatprep.subr.mxu0 0.0
    %439 = vmatpush1.msra.mxu0 0.0
    %440 = vmatprep.subr.mxu0 0.0
    %441 = vmatpush1.msra.mxu0 0.0
    %442 = vmatprep.subr.mxu0 0.0
    %443 = vmatpush1.msra.mxu0 0.0
    %444 = vmatprep.subr.mxu0 0.0
    %445 = vmatpush1.msra.mxu0 0.0
    %446 = vmatprep.subr.mxu0 0.0
    %447 = vmatpush1.msra.mxu0 0.0
    %448 = vmatprep.subr.mxu0 0.0
    %449 = vmatpush1.msra.mxu0 0.0
    %450 = vmatprep.subr.mxu0 0.0
    %451 = vmatpush1.msra.mxu0 0.0
    %452 = vmatprep.subr.mxu0 0.0
    %453 = vmatpush1.msra.mxu0 0.0
    %454 = vmatprep.subr.mxu0 0.0
    %455 = vmatpush1.msra.mxu0 0.0
    %456 = vmatprep.subr.mxu0 0.0
    %457 = vmatpush1.msra.mxu0 0.0
    %458 = vmatprep.subr.mxu0 0.0
    %459 = vmatpush1.msra.mxu0 0.0
    %460 = vmatprep.subr.mxu0 0.0
    %461 = vmatpush1.msra.mxu0 0.0
    %462 = vmatprep.subr.mxu0 0.0
    %463 = vmatpush1.msra.mxu0 0.0
    %464 = vmatprep.subr.mxu0 0.0
    %465 = vmatpush1.msra.mxu0 0.0
    %466 = vmatprep.subr.mxu0 0.0
    %467 = vmatpush1.msra.mxu0 0.0
    %468 = vmatprep.subr.mxu0 0.0
    %469 = vmatpush1.msra.mxu0 0.0
    %470 = vmatprep.subr.mxu0 0.0
    %471 = vmatpush1.msra.mxu0 0.0
    %472 = vmatprep.subr.mxu0 0.0
    %473 = vmatpush1.msra.mxu0 0.0
    %474 = vmatprep.subr.mxu0 0.0
    %475 = vmatpush1.msra.mxu0 0.0
    %476 = vmatprep.subr.mxu0 0.0
    %477 = vmatpush1.msra.mxu0 0.0
    %478 = vmatprep.subr.mxu0 0.0
    %479 = vmatpush1.msra.mxu0 0.0
    %480 = vmatprep.subr.mxu0 0.0
    %481 = vmatpush1.msra.mxu0 0.0
    %482 = vmatprep.subr.mxu0 0.0
    %483 = vmatpush1.msra.mxu0 0.0
    %484 = vmatprep.subr.mxu0 0.0
    %485 = vmatpush1.msra.mxu0 0.0
    %486 = vmatprep.subr.mxu0 0.0
    %487 = vmatpush1.msra.mxu0 0.0
    %488 = vmatprep.subr.mxu0 0.0
    %489 = vmatpush1.msra.mxu0 0.0
    %490 = vmatprep.subr.mxu0 0.0
    %491 = vmatpush1.msra.mxu0 0.0
    %492 = vmatprep.subr.mxu0 0.0
    %493 = vmatpush1.msra.mxu0 0.0
    %494 = vmatprep.subr.mxu0 0.0
    %495 = vmatpush1.msra.mxu0 0.0
    %496 = vmatprep.subr.mxu0 0.0
    %497 = vmatpush1.msra.mxu0 0.0
    %498 = vmatprep.subr.mxu0 0.0
    %499 = vmatpush1.msra.mxu0 0.0
    %500 = vmatprep.mubr.f32.mxu0 0.0
    %v501 = vand.u32 %v143, 4294901760
    %502 = vmatmul.mubr.f32.gmra.mrb[0].mxu0 %v501
    %v503 = vpop.f32.mrb[0].mxu0
    %v504 = vadd.f32 %v433, %v503
    %v505 = vpop.f32.mrb[0].mxu0
    %506 = vdwg.mxu0
    %507 = vmatprep.subr.mxu0 0.0
    %508 = vmatpush1.msra.mxu0 1.0
    %509 = vmatprep.subr.mxu0 0.0
    %510 = vmatpush1.msra.mxu0 1.0
    %511 = vmatprep.subr.mxu0 0.0
    %512 = vmatpush1.msra.mxu0 1.0
    %513 = vmatprep.subr.mxu0 0.0
    %514 = vmatpush1.msra.mxu0 1.0
    %515 = vmatprep.subr.mxu0 0.0
    %516 = vmatpush1.msra.mxu0 0.0
    %517 = vmatprep.subr.mxu0 0.0
    %518 = vmatpush1.msra.mxu0 0.0
    %519 = vmatprep.subr.mxu0 0.0
    %520 = vmatpush1.msra.mxu0 0.0
    %521 = vmatprep.subr.mxu0 0.0
    %522 = vmatpush1.msra.mxu0 0.0
    %523 = vmatprep.subr.mxu0 0.0
    %524 = vmatpush1.msra.mxu0 0.0
    %525 = vmatprep.subr.mxu0 0.0
    %526 = vmatpush1.msra.mxu0 0.0
    %527 = vmatprep.subr.mxu0 0.0
    %528 = vmatpush1.msra.mxu0 0.0
    %529 = vmatprep.subr.mxu0 0.0
    %530 = vmatpush1.msra.mxu0 0.0
    %531 = vmatprep.subr.mxu0 0.0
    %532 = vmatpush1.msra.mxu0 0.0
    %533 = vmatprep.subr.mxu0 0.0
    %534 = vmatpush1.msra.mxu0 0.0
    %535 = vmatprep.subr.mxu0 0.0
    %536 = vmatpush1.msra.mxu0 0.0
    %537 = vmatprep.subr.mxu0 0.0
    %538 = vmatpush1.msra.mxu0 0.0
    %539 = vmatprep.subr.mxu0 0.0
    %540 = vmatpush1.msra.mxu0 0.0
    %541 = vmatprep.subr.mxu0 0.0
    %542 = vmatpush1.msra.mxu0 0.0
    %543 = vmatprep.subr.mxu0 0.0
    %544 = vmatpush1.msra.mxu0 0.0
    %545 = vmatprep.subr.mxu0 0.0
    %546 = vmatpush1.msra.mxu0 0.0
    %547 = vmatprep.subr.mxu0 0.0
    %548 = vmatpush1.msra.mxu0 0.0
    %549 = vmatprep.subr.mxu0 0.0
    %550 = vmatpush1.msra.mxu0 0.0
    %551 = vmatprep.subr.mxu0 0.0
    %552 = vmatpush1.msra.mxu0 0.0
    %553 = vmatprep.subr.mxu0 0.0
    %554 = vmatpush1.msra.mxu0 0.0
    %555 = vmatprep.subr.mxu0 0.0
    %556 = vmatpush1.msra.mxu0 0.0
    %557 = vmatprep.subr.mxu0 0.0
    %558 = vmatpush1.msra.mxu0 0.0
    %559 = vmatprep.subr.mxu0 0.0
    %560 = vmatpush1.msra.mxu0 0.0
    %561 = vmatprep.subr.mxu0 0.0
    %562 = vmatpush1.msra.mxu0 0.0
    %563 = vmatprep.subr.mxu0 0.0
    %564 = vmatpush1.msra.mxu0 0.0
    %565 = vmatprep.subr.mxu0 0.0
    %566 = vmatpush1.msra.mxu0 0.0
    %567 = vmatprep.subr.mxu0 0.0
    %568 = vmatpush1.msra.mxu0 0.0
    %569 = vmatprep.subr.mxu0 0.0
    %570 = vmatpush1.msra.mxu0 0.0
    %571 = vmatprep.mubr.f32.mxu0 0.0
    %v572 = vand.u32 %v143, 4294901760
    %573 = vmatmul.mubr.f32.gmra.mrb[0].mxu0 %v572
    %v574 = vpop.f32.mrb[0].mxu0
    %v575 = vadd.f32 %v504, %v574
    %v576 = vpop.f32.mrb[0].mxu0
    %577 = vdwg.mxu0
    %v578 = vmul.f32 %v575, 0.03125
    %580 = vset.pattern.permute.xlu0 0
    %581 = vperm.xlu0 %580, %v578
    %v582 = vpop.permute.xlu0 %581
    %v584 = vsub.f32 %v138, %v582
    %v585 = vmul.f32 %v584, %v584
    %v587 = vsel %vm141, %v585, 0
    %589 = vmatprep.subr.mxu0 0.0
    %590 = vmatpush1.msra.mxu0 1.0
    %591 = vmatprep.subr.mxu0 0.0
    %592 = vmatpush1.msra.mxu0 1.0
    %593 = vmatprep.subr.mxu0 0.0
    %594 = vmatpush1.msra.mxu0 1.0
    %595 = vmatprep.subr.mxu0 0.0
    %596 = vmatpush1.msra.mxu0 1.0
    %597 = vmatprep.subr.mxu0 0.0
    %598 = vmatpush1.msra.mxu0 0.0
    %599 = vmatprep.subr.mxu0 0.0
    %600 = vmatpush1.msra.mxu0 0.0
    %601 = vmatprep.subr.mxu0 0.0
    %602 = vmatpush1.msra.mxu0 0.0
    %603 = vmatprep.subr.mxu0 0.0
    %604 = vmatpush1.msra.mxu0 0.0
    %605 = vmatprep.subr.mxu0 0.0
    %606 = vmatpush1.msra.mxu0 0.0
    %607 = vmatprep.subr.mxu0 0.0
    %608 = vmatpush1.msra.mxu0 0.0
    %609 = vmatprep.subr.mxu0 0.0
    %610 = vmatpush1.msra.mxu0 0.0
    %611 = vmatprep.subr.mxu0 0.0
    %612 = vmatpush1.msra.mxu0 0.0
    %613 = vmatprep.subr.mxu0 0.0
    %614 = vmatpush1.msra.mxu0 0.0
    %615 = vmatprep.subr.mxu0 0.0
    %616 = vmatpush1.msra.mxu0 0.0
    %617 = vmatprep.subr.mxu0 0.0
    %618 = vmatpush1.msra.mxu0 0.0
    %619 = vmatprep.subr.mxu0 0.0
    %620 = vmatpush1.msra.mxu0 0.0
    %621 = vmatprep.subr.mxu0 0.0
    %622 = vmatpush1.msra.mxu0 0.0
    %623 = vmatprep.subr.mxu0 0.0
    %624 = vmatpush1.msra.mxu0 0.0
    %625 = vmatprep.subr.mxu0 0.0
    %626 = vmatpush1.msra.mxu0 0.0
    %627 = vmatprep.subr.mxu0 0.0
    %628 = vmatpush1.msra.mxu0 0.0
    %629 = vmatprep.subr.mxu0 0.0
    %630 = vmatpush1.msra.mxu0 0.0
    %631 = vmatprep.subr.mxu0 0.0
    %632 = vmatpush1.msra.mxu0 0.0
    %633 = vmatprep.subr.mxu0 0.0
    %634 = vmatpush1.msra.mxu0 0.0
    %635 = vmatprep.subr.mxu0 0.0
    %636 = vmatpush1.msra.mxu0 0.0
    %637 = vmatprep.subr.mxu0 0.0
    %638 = vmatpush1.msra.mxu0 0.0
    %639 = vmatprep.subr.mxu0 0.0
    %640 = vmatpush1.msra.mxu0 0.0
    %641 = vmatprep.subr.mxu0 0.0
    %642 = vmatpush1.msra.mxu0 0.0
    %643 = vmatprep.subr.mxu0 0.0
    %644 = vmatpush1.msra.mxu0 0.0
    %645 = vmatprep.subr.mxu0 0.0
    %646 = vmatpush1.msra.mxu0 0.0
    %647 = vmatprep.subr.mxu0 0.0
    %648 = vmatpush1.msra.mxu0 0.0
    %649 = vmatprep.subr.mxu0 0.0
    %650 = vmatpush1.msra.mxu0 0.0
    %651 = vmatprep.subr.mxu0 0.0
    %652 = vmatpush1.msra.mxu0 0.0
    %653 = vmatprep.mubr.f32.mxu0 0.0
    %v654 = vand.u32 %v587, 4294901760
    %v655 = vsub.f32 %v587, %v654
    %v656 = vand.u32 %v655, 4294901760
    %v657 = vsub.f32 %v655, %v656
    %v658 = vand.u32 %v657, 4294901760
    %659 = vmatmul.mubr.f32.gmra.mrb[0].mxu0 %v658
    %v660 = vpop.f32.mrb[0].mxu0
    %v661 = vadd.f32 0.0, %v660
    %v662 = vpop.f32.mrb[0].mxu0
    %663 = vdwg.mxu0
    %664 = vmatprep.subr.mxu0 0.0
    %665 = vmatpush1.msra.mxu0 0.0
    %666 = vmatprep.subr.mxu0 0.0
    %667 = vmatpush1.msra.mxu0 0.0
    %668 = vmatprep.subr.mxu0 0.0
    %669 = vmatpush1.msra.mxu0 0.0
    %670 = vmatprep.subr.mxu0 0.0
    %671 = vmatpush1.msra.mxu0 0.0
    %672 = vmatprep.subr.mxu0 0.0
    %673 = vmatpush1.msra.mxu0 0.0
    %674 = vmatprep.subr.mxu0 0.0
    %675 = vmatpush1.msra.mxu0 0.0
    %676 = vmatprep.subr.mxu0 0.0
    %677 = vmatpush1.msra.mxu0 0.0
    %678 = vmatprep.subr.mxu0 0.0
    %679 = vmatpush1.msra.mxu0 0.0
    %680 = vmatprep.subr.mxu0 0.0
    %681 = vmatpush1.msra.mxu0 0.0
    %682 = vmatprep.subr.mxu0 0.0
    %683 = vmatpush1.msra.mxu0 0.0
    %684 = vmatprep.subr.mxu0 0.0
    %685 = vmatpush1.msra.mxu0 0.0
    %686 = vmatprep.subr.mxu0 0.0
    %687 = vmatpush1.msra.mxu0 0.0
    %688 = vmatprep.subr.mxu0 0.0
    %689 = vmatpush1.msra.mxu0 0.0
    %690 = vmatprep.subr.mxu0 0.0
    %691 = vmatpush1.msra.mxu0 0.0
    %692 = vmatprep.subr.mxu0 0.0
    %693 = vmatpush1.msra.mxu0 0.0
    %694 = vmatprep.subr.mxu0 0.0
    %695 = vmatpush1.msra.mxu0 0.0
    %696 = vmatprep.subr.mxu0 0.0
    %697 = vmatpush1.msra.mxu0 0.0
    %698 = vmatprep.subr.mxu0 0.0
    %699 = vmatpush1.msra.mxu0 0.0
    %700 = vmatprep.subr.mxu0 0.0
    %701 = vmatpush1.msra.mxu0 0.0
    %702 = vmatprep.subr.mxu0 0.0
    %703 = vmatpush1.msra.mxu0 0.0
    %704 = vmatprep.subr.mxu0 0.0
    %705 = vmatpush1.msra.mxu0 0.0
    %706 = vmatprep.subr.mxu0 0.0
    %707 = vmatpush1.msra.mxu0 0.0
    %708 = vmatprep.subr.mxu0 0.0
    %709 = vmatpush1.msra.mxu0 0.0
    %710 = vmatprep.subr.mxu0 0.0
    %711 = vmatpush1.msra.mxu0 0.0
    %712 = vmatprep.subr.mxu0 0.0
    %713 = vmatpush1.msra.mxu0 0.0
    %714 = vmatprep.subr.mxu0 0.0
    %715 = vmatpush1.msra.mxu0 0.0
    %716 = vmatprep.subr.mxu0 0.0
    %717 = vmatpush1.msra.mxu0 0.0
    %718 = vmatprep.subr.mxu0 0.0
    %719 = vmatpush1.msra.mxu0 0.0
    %720 = vmatprep.subr.mxu0 0.0
    %721 = vmatpush1.msra.mxu0 0.0
    %722 = vmatprep.subr.mxu0 0.0
    %723 = vmatpush1.msra.mxu0 0.0
    %724 = vmatprep.subr.mxu0 0.0
    %725 = vmatpush1.msra.mxu0 0.0
    %726 = vmatprep.subr.mxu0 0.0
    %727 = vmatpush1.msra.mxu0 0.0
    %728 = vmatprep.mubr.f32.mxu0 0.0
    %v729 = vand.u32 %v587, 4294901760
    %730 = vmatmul.mubr.f32.gmra.mrb[0].mxu0 %v729
    %v731 = vpop.f32.mrb[0].mxu0
    %v732 = vadd.f32 %v661, %v731
    %v733 = vpop.f32.mrb[0].mxu0
    %734 = vdwg.mxu0
    %735 = vmatprep.subr.mxu0 0.0
    %736 = vmatpush1.msra.mxu0 0.0
    %737 = vmatprep.subr.mxu0 0.0
    %738 = vmatpush1.msra.mxu0 0.0
    %739 = vmatprep.subr.mxu0 0.0
    %740 = vmatpush1.msra.mxu0 0.0
    %741 = vmatprep.subr.mxu0 0.0
    %742 = vmatpush1.msra.mxu0 0.0
    %743 = vmatprep.subr.mxu0 0.0
    %744 = vmatpush1.msra.mxu0 0.0
    %745 = vmatprep.subr.mxu0 0.0
    %746 = vmatpush1.msra.mxu0 0.0
    %747 = vmatprep.subr.mxu0 0.0
    %748 = vmatpush1.msra.mxu0 0.0
    %749 = vmatprep.subr.mxu0 0.0
    %750 = vmatpush1.msra.mxu0 0.0
    %751 = vmatprep.subr.mxu0 0.0
    %752 = vmatpush1.msra.mxu0 0.0
    %753 = vmatprep.subr.mxu0 0.0
    %754 = vmatpush1.msra.mxu0 0.0
    %755 = vmatprep.subr.mxu0 0.0
    %756 = vmatpush1.msra.mxu0 0.0
    %757 = vmatprep.subr.mxu0 0.0
    %758 = vmatpush1.msra.mxu0 0.0
    %759 = vmatprep.subr.mxu0 0.0
    %760 = vmatpush1.msra.mxu0 0.0
    %761 = vmatprep.subr.mxu0 0.0
    %762 = vmatpush1.msra.mxu0 0.0
    %763 = vmatprep.subr.mxu0 0.0
    %764 = vmatpush1.msra.mxu0 0.0
    %765 = vmatprep.subr.mxu0 0.0
    %766 = vmatpush1.msra.mxu0 0.0
    %767 = vmatprep.subr.mxu0 0.0
    %768 = vmatpush1.msra.mxu0 0.0
    %769 = vmatprep.subr.mxu0 0.0
    %770 = vmatpush1.msra.mxu0 0.0
    %771 = vmatprep.subr.mxu0 0.0
    %772 = vmatpush1.msra.mxu0 0.0
    %773 = vmatprep.subr.mxu0 0.0
    %774 = vmatpush1.msra.mxu0 0.0
    %775 = vmatprep.subr.mxu0 0.0
    %776 = vmatpush1.msra.mxu0 0.0
    %777 = vmatprep.subr.mxu0 0.0
    %778 = vmatpush1.msra.mxu0 0.0
    %779 = vmatprep.subr.mxu0 0.0
    %780 = vmatpush1.msra.mxu0 0.0
    %781 = vmatprep.subr.mxu0 0.0
    %782 = vmatpush1.msra.mxu0 0.0
    %783 = vmatprep.subr.mxu0 0.0
    %784 = vmatpush1.msra.mxu0 0.0
    %785 = vmatprep.subr.mxu0 0.0
    %786 = vmatpush1.msra.mxu0 0.0
    %787 = vmatprep.subr.mxu0 0.0
    %788 = vmatpush1.msra.mxu0 0.0
    %789 = vmatprep.subr.mxu0 0.0
    %790 = vmatpush1.msra.mxu0 0.0
    %791 = vmatprep.subr.mxu0 0.0
    %792 = vmatpush1.msra.mxu0 0.0
    %793 = vmatprep.subr.mxu0 0.0
    %794 = vmatpush1.msra.mxu0 0.0
    %795 = vmatprep.subr.mxu0 0.0
    %796 = vmatpush1.msra.mxu0 0.0
    %797 = vmatprep.subr.mxu0 0.0
    %798 = vmatpush1.msra.mxu0 0.0
    %799 = vmatprep.mubr.f32.mxu0 0.0
    %v800 = vand.u32 %v587, 4294901760
    %v801 = vsub.f32 %v587, %v800
    %802 = vmatmul.mubr.f32.gmra.mrb[0].mxu0 %v801
    %v803 = vpop.f32.mrb[0].mxu0
    %v804 = vadd.f32 %v732, %v803
    %v805 = vpop.f32.mrb[0].mxu0
    %806 = vdwg.mxu0
    %807 = vmatprep.subr.mxu0 0.0
    %808 = vmatpush1.msra.mxu0 1.0
    %809 = vmatprep.subr.mxu0 0.0
    %810 = vmatpush1.msra.mxu0 1.0
    %811 = vmatprep.subr.mxu0 0.0
    %812 = vmatpush1.msra.mxu0 1.0
    %813 = vmatprep.subr.mxu0 0.0
    %814 = vmatpush1.msra.mxu0 1.0
    %815 = vmatprep.subr.mxu0 0.0
    %816 = vmatpush1.msra.mxu0 0.0
    %817 = vmatprep.subr.mxu0 0.0
    %818 = vmatpush1.msra.mxu0 0.0
    %819 = vmatprep.subr.mxu0 0.0
    %820 = vmatpush1.msra.mxu0 0.0
    %821 = vmatprep.subr.mxu0 0.0
    %822 = vmatpush1.msra.mxu0 0.0
    %823 = vmatprep.subr.mxu0 0.0
    %824 = vmatpush1.msra.mxu0 0.0
    %825 = vmatprep.subr.mxu0 0.0
    %826 = vmatpush1.msra.mxu0 0.0
    %827 = vmatprep.subr.mxu0 0.0
    %828 = vmatpush1.msra.mxu0 0.0
    %829 = vmatprep.subr.mxu0 0.0
    %830 = vmatpush1.msra.mxu0 0.0
    %831 = vmatprep.subr.mxu0 0.0
    %832 = vmatpush1.msra.mxu0 0.0
    %833 = vmatprep.subr.mxu0 0.0
    %834 = vmatpush1.msra.mxu0 0.0
    %835 = vmatprep.subr.mxu0 0.0
    %836 = vmatpush1.msra.mxu0 0.0
    %837 = vmatprep.subr.mxu0 0.0
    %838 = vmatpush1.msra.mxu0 0.0
    %839 = vmatprep.subr.mxu0 0.0
    %840 = vmatpush1.msra.mxu0 0.0
    %841 = vmatprep.subr.mxu0 0.0
    %842 = vmatpush1.msra.mxu0 0.0
    %843 = vmatprep.subr.mxu0 0.0
    %844 = vmatpush1.msra.mxu0 0.0
    %845 = vmatprep.subr.mxu0 0.0
    %846 = vmatpush1.msra.mxu0 0.0
    %847 = vmatprep.subr.mxu0 0.0
    %848 = vmatpush1.msra.mxu0 0.0
    %849 = vmatprep.subr.mxu0 0.0
    %850 = vmatpush1.msra.mxu0 0.0
    %851 = vmatprep.subr.mxu0 0.0
    %852 = vmatpush1.msra.mxu0 0.0
    %853 = vmatprep.subr.mxu0 0.0
    %854 = vmatpush1.msra.mxu0 0.0
    %855 = vmatprep.subr.mxu0 0.0
    %856 = vmatpush1.msra.mxu0 0.0
    %857 = vmatprep.subr.mxu0 0.0
    %858 = vmatpush1.msra.mxu0 0.0
    %859 = vmatprep.subr.mxu0 0.0
    %860 = vmatpush1.msra.mxu0 0.0
    %861 = vmatprep.subr.mxu0 0.0
    %862 = vmatpush1.msra.mxu0 0.0
    %863 = vmatprep.subr.mxu0 0.0
    %864 = vmatpush1.msra.mxu0 0.0
    %865 = vmatprep.subr.mxu0 0.0
    %866 = vmatpush1.msra.mxu0 0.0
    %867 = vmatprep.subr.mxu0 0.0
    %868 = vmatpush1.msra.mxu0 0.0
    %869 = vmatprep.subr.mxu0 0.0
    %870 = vmatpush1.msra.mxu0 0.0
    %871 = vmatprep.mubr.f32.mxu0 0.0
    %v872 = vand.u32 %v587, 4294901760
    %v873 = vsub.f32 %v587, %v872
    %v874 = vand.u32 %v873, 4294901760
    %875 = vmatmul.mubr.f32.gmra.mrb[0].mxu0 %v874
    %v876 = vpop.f32.mrb[0].mxu0
    %v877 = vadd.f32 %v804, %v876
    %v878 = vpop.f32.mrb[0].mxu0
    %879 = vdwg.mxu0
    %880 = vmatprep.subr.mxu0 0.0
    %881 = vmatpush1.msra.mxu0 0.0
    %882 = vmatprep.subr.mxu0 0.0
    %883 = vmatpush1.msra.mxu0 0.0
    %884 = vmatprep.subr.mxu0 0.0
    %885 = vmatpush1.msra.mxu0 0.0
    %886 = vmatprep.subr.mxu0 0.0
    %887 = vmatpush1.msra.mxu0 0.0
    %888 = vmatprep.subr.mxu0 0.0
    %889 = vmatpush1.msra.mxu0 0.0
    %890 = vmatprep.subr.mxu0 0.0
    %891 = vmatpush1.msra.mxu0 0.0
    %892 = vmatprep.subr.mxu0 0.0
    %893 = vmatpush1.msra.mxu0 0.0
    %894 = vmatprep.subr.mxu0 0.0
    %895 = vmatpush1.msra.mxu0 0.0
    %896 = vmatprep.subr.mxu0 0.0
    %897 = vmatpush1.msra.mxu0 0.0
    %898 = vmatprep.subr.mxu0 0.0
    %899 = vmatpush1.msra.mxu0 0.0
    %900 = vmatprep.subr.mxu0 0.0
    %901 = vmatpush1.msra.mxu0 0.0
    %902 = vmatprep.subr.mxu0 0.0
    %903 = vmatpush1.msra.mxu0 0.0
    %904 = vmatprep.subr.mxu0 0.0
    %905 = vmatpush1.msra.mxu0 0.0
    %906 = vmatprep.subr.mxu0 0.0
    %907 = vmatpush1.msra.mxu0 0.0
    %908 = vmatprep.subr.mxu0 0.0
    %909 = vmatpush1.msra.mxu0 0.0
    %910 = vmatprep.subr.mxu0 0.0
    %911 = vmatpush1.msra.mxu0 0.0
    %912 = vmatprep.subr.mxu0 0.0
    %913 = vmatpush1.msra.mxu0 0.0
    %914 = vmatprep.subr.mxu0 0.0
    %915 = vmatpush1.msra.mxu0 0.0
    %916 = vmatprep.subr.mxu0 0.0
    %917 = vmatpush1.msra.mxu0 0.0
    %918 = vmatprep.subr.mxu0 0.0
    %919 = vmatpush1.msra.mxu0 0.0
    %920 = vmatprep.subr.mxu0 0.0
    %921 = vmatpush1.msra.mxu0 0.0
    %922 = vmatprep.subr.mxu0 0.0
    %923 = vmatpush1.msra.mxu0 0.0
    %924 = vmatprep.subr.mxu0 0.0
    %925 = vmatpush1.msra.mxu0 0.0
    %926 = vmatprep.subr.mxu0 0.0
    %927 = vmatpush1.msra.mxu0 0.0
    %928 = vmatprep.subr.mxu0 0.0
    %929 = vmatpush1.msra.mxu0 0.0
    %930 = vmatprep.subr.mxu0 0.0
    %931 = vmatpush1.msra.mxu0 0.0
    %932 = vmatprep.subr.mxu0 0.0
    %933 = vmatpush1.msra.mxu0 0.0
    %934 = vmatprep.subr.mxu0 0.0
    %935 = vmatpush1.msra.mxu0 0.0
    %936 = vmatprep.subr.mxu0 0.0
    %937 = vmatpush1.msra.mxu0 0.0
    %938 = vmatprep.subr.mxu0 0.0
    %939 = vmatpush1.msra.mxu0 0.0
    %940 = vmatprep.subr.mxu0 0.0
    %941 = vmatpush1.msra.mxu0 0.0
    %942 = vmatprep.subr.mxu0 0.0
    %943 = vmatpush1.msra.mxu0 0.0
    %944 = vmatprep.mubr.f32.mxu0 0.0
    %v945 = vand.u32 %v587, 4294901760
    %946 = vmatmul.mubr.f32.gmra.mrb[0].mxu0 %v945
    %v947 = vpop.f32.mrb[0].mxu0
    %v948 = vadd.f32 %v877, %v947
    %v949 = vpop.f32.mrb[0].mxu0
    %950 = vdwg.mxu0
    %951 = vmatprep.subr.mxu0 0.0
    %952 = vmatpush1.msra.mxu0 1.0
    %953 = vmatprep.subr.mxu0 0.0
    %954 = vmatpush1.msra.mxu0 1.0
    %955 = vmatprep.subr.mxu0 0.0
    %956 = vmatpush1.msra.mxu0 1.0
    %957 = vmatprep.subr.mxu0 0.0
    %958 = vmatpush1.msra.mxu0 1.0
    %959 = vmatprep.subr.mxu0 0.0
    %960 = vmatpush1.msra.mxu0 0.0
    %961 = vmatprep.subr.mxu0 0.0
    %962 = vmatpush1.msra.mxu0 0.0
    %963 = vmatprep.subr.mxu0 0.0
    %964 = vmatpush1.msra.mxu0 0.0
    %965 = vmatprep.subr.mxu0 0.0
    %966 = vmatpush1.msra.mxu0 0.0
    %967 = vmatprep.subr.mxu0 0.0
    %968 = vmatpush1.msra.mxu0 0.0
    %969 = vmatprep.subr.mxu0 0.0
    %970 = vmatpush1.msra.mxu0 0.0
    %971 = vmatprep.subr.mxu0 0.0
    %972 = vmatpush1.msra.mxu0 0.0
    %973 = vmatprep.subr.mxu0 0.0
    %974 = vmatpush1.msra.mxu0 0.0
    %975 = vmatprep.subr.mxu0 0.0
    %976 = vmatpush1.msra.mxu0 0.0
    %977 = vmatprep.subr.mxu0 0.0
    %978 = vmatpush1.msra.mxu0 0.0
    %979 = vmatprep.subr.mxu0 0.0
    %980 = vmatpush1.msra.mxu0 0.0
    %981 = vmatprep.subr.mxu0 0.0
    %982 = vmatpush1.msra.mxu0 0.0
    %983 = vmatprep.subr.mxu0 0.0
    %984 = vmatpush1.msra.mxu0 0.0
    %985 = vmatprep.subr.mxu0 0.0
    %986 = vmatpush1.msra.mxu0 0.0
    %987 = vmatprep.subr.mxu0 0.0
    %988 = vmatpush1.msra.mxu0 0.0
    %989 = vmatprep.subr.mxu0 0.0
    %990 = vmatpush1.msra.mxu0 0.0
    %991 = vmatprep.subr.mxu0 0.0
    %992 = vmatpush1.msra.mxu0 0.0
    %993 = vmatprep.subr.mxu0 0.0
    %994 = vmatpush1.msra.mxu0 0.0
    %995 = vmatprep.subr.mxu0 0.0
    %996 = vmatpush1.msra.mxu0 0.0
    %997 = vmatprep.subr.mxu0 0.0
    %998 = vmatpush1.msra.mxu0 0.0
    %999 = vmatprep.subr.mxu0 0.0
    %1000 = vmatpush1.msra.mxu0 0.0
    %1001 = vmatprep.subr.mxu0 0.0
    %1002 = vmatpush1.msra.mxu0 0.0
    %1003 = vmatprep.subr.mxu0 0.0
    %1004 = vmatpush1.msra.mxu0 0.0
    %1005 = vmatprep.subr.mxu0 0.0
    %1006 = vmatpush1.msra.mxu0 0.0
    %1007 = vmatprep.subr.mxu0 0.0
    %1008 = vmatpush1.msra.mxu0 0.0
    %1009 = vmatprep.subr.mxu0 0.0
    %1010 = vmatpush1.msra.mxu0 0.0
    %1011 = vmatprep.subr.mxu0 0.0
    %1012 = vmatpush1.msra.mxu0 0.0
    %1013 = vmatprep.subr.mxu0 0.0
    %1014 = vmatpush1.msra.mxu0 0.0
    %1015 = vmatprep.mubr.f32.mxu0 0.0
    %v1016 = vand.u32 %v587, 4294901760
    %1017 = vmatmul.mubr.f32.gmra.mrb[0].mxu0 %v1016
    %v1018 = vpop.f32.mrb[0].mxu0
    %v1019 = vadd.f32 %v948, %v1018
    %v1020 = vpop.f32.mrb[0].mxu0
    %1021 = vdwg.mxu0
    %v1022 = vmul.f32 %v1019, 0.03125
    %v1023 = vadd.f32 %v1022, 1e-05
    %v1024 = vrsqrt.pop %v1023
    %1026 = vset.pattern.permute.xlu0 0
    %1027 = vperm.xlu0 %1026, %v1024
    %v1028 = vpop.permute.xlu0 %1027
    %v1030 = vmul.f32 %v584, %v1028
    %v1031 = vld [vmem:[%s3] sm:$0x1]
    %v1033 = vlaneseq
    %v1034 = vshrl.u32 %v1033, 7
    %v1035 = vsub.s32 0, %v1034
    %v1036 = vrot.slane %v1031, %v1035
    %v1038 = vmul.f32 %v1030, %v1036
    %v1039 = vld [vmem:[%s4] sm:$0x1]
    %v1041 = vlaneseq
    %v1042 = vshrl.u32 %v1041, 7
    %v1043 = vsub.s32 0, %v1042
    %v1044 = vrot.slane %v1039, %v1043
    %v1046 = vadd.f32 %v1038, %v1044
    %v1047 = vtanh.pop %v1046
    %1048 = vst.msk [vmem:[#allocation9] sm:$0xff] %vm141, %v1047
    %v1049 = vld [vmem:[%s5] sm:$0x1]
    %s1050 = sld [smem:[#allocation2]]
    %v1051 = vstv %s1050
    %v1053 = vsel %vm141, %v1049, 0
    %v1056 = vsel %vm141, %v1047, 0
    %1058 = vmatprep.subr.mxu0 0.0
    %1059 = vmatpush1.xpose.msra.mxu0 %v1056
    %1060 = vmatprep.subr.mxu0 0.0
    %1061 = vmatpush1.xpose.msra.mxu0 0.0
    %1062 = vmatprep.subr.mxu0 0.0
    %1063 = vmatpush1.xpose.msra.mxu0 0.0
    %1064 = vmatprep.subr.mxu0 0.0
    %1065 = vmatpush1.xpose.msra.mxu0 0.0
    %1066 = vmatprep.subr.mxu0 0.0
    %1067 = vmatpush1.xpose.msra.mxu0 0.0
    %1068 = vmatprep.subr.mxu0 0.0
    %1069 = vmatpush1.xpose.msra.mxu0 0.0
    %1070 = vmatprep.subr.mxu0 0.0
    %1071 = vmatpush1.xpose.msra.mxu0 0.0
    %1072 = vmatprep.subr.mxu0 0.0
    %1073 = vmatpush1.xpose.msra.mxu0 0.0
    %1074 = vmatprep.subr.mxu0 0.0
    %1075 = vmatpush1.xpose.msra.mxu0 0.0
    %1076 = vmatprep.subr.mxu0 0.0
    %1077 = vmatpush1.xpose.msra.mxu0 0.0
    %1078 = vmatprep.subr.mxu0 0.0
    %1079 = vmatpush1.xpose.msra.mxu0 0.0
    %1080 = vmatprep.subr.mxu0 0.0
    %1081 = vmatpush1.xpose.msra.mxu0 0.0
    %1082 = vmatprep.subr.mxu0 0.0
    %1083 = vmatpush1.xpose.msra.mxu0 0.0
    %1084 = vmatprep.subr.mxu0 0.0
    %1085 = vmatpush1.xpose.msra.mxu0 0.0
    %1086 = vmatprep.subr.mxu0 0.0
    %1087 = vmatpush1.xpose.msra.mxu0 0.0
    %1088 = vmatprep.subr.mxu0 0.0
    %1089 = vmatpush1.xpose.msra.mxu0 0.0
    %1090 = vmatprep.subr.mxu0 0.0
    %1091 = vmatpush1.xpose.msra.mxu0 0.0
    %1092 = vmatprep.subr.mxu0 0.0
    %1093 = vmatpush1.xpose.msra.mxu0 0.0
    %1094 = vmatprep.subr.mxu0 0.0
    %1095 = vmatpush1.xpose.msra.mxu0 0.0
    %1096 = vmatprep.subr.mxu0 0.0
    %1097 = vmatpush1.xpose.msra.mxu0 0.0
    %1098 = vmatprep.subr.mxu0 0.0
    %1099 = vmatpush1.xpose.msra.mxu0 0.0
    %1100 = vmatprep.subr.mxu0 0.0
    %1101 = vmatpush1.xpose.msra.mxu0 0.0
    %1102 = vmatprep.subr.mxu0 0.0
    %1103 = vmatpush1.xpose.msra.mxu0 0.0
    %1104 = vmatprep.subr.mxu0 0.0
    %1105 = vmatpush1.xpose.msra.mxu0 0.0
    %1106 = vmatprep.subr.mxu0 0.0
    %1107 = vmatpush1.xpose.msra.mxu0 0.0
    %1108 = vmatprep.subr.mxu0 0.0
    %1109 = vmatpush1.xpose.msra.mxu0 0.0
    %1110 = vmatprep.subr.mxu0 0.0
    %1111 = vmatpush1.xpose.msra.mxu0 0.0
    %1112 = vmatprep.subr.mxu0 0.0
    %1113 = vmatpush1.xpose.msra.mxu0 0.0
    %1114 = vmatprep.subr.mxu0 0.0
    %1115 = vmatpush1.xpose.msra.mxu0 0.0
    %1116 = vmatprep.subr.mxu0 0.0
    %1117 = vmatpush1.xpose.msra.mxu0 0.0
    %1118 = vmatprep.subr.mxu0 0.0
    %1119 = vmatpush1.xpose.msra.mxu0 0.0
    %1120 = vmatprep.subr.mxu0 0.0
    %1121 = vmatpush1.xpose.msra.mxu0 0.0
    %1122 = vmatprep.mubr.f32.mxu0 0.0
    %1123 = vmatmul.mubr.f32.gmra.mrb[0].mxu0 %v1053
    %v1124 = vpop.f32.mrb[0].mxu0
    %v1125 = vadd.f32 %v1051, %v1124
    %v1126 = vpop.f32.mrb[0].mxu0
    %1127 = vdwg.mxu0
    %v1128 = vxor.u32 %v1125, 2147483648
    %v1129 = vmul.f32 %v1128, 1.442695
    %v1130 = vpow.pop %v1129
    %v1131 = vadd.f32 %v1130, 1.0
    %v1132 = vrcp.pop %v1131
    %v1133 = vmul.f32 1.0, %v1132
    %vm1134 = vcmask 57344
    %1135 = vst.msk [vmem:[#allocation8] sm:$0x1] %vm1134, %v1133
    // Predicated region
    $region38: #{tpu_custom_call.1} parent=1 // pred_check
      _
    $region39: #{tpu_custom_call.1} parent=1 // pred_check_branch
      %1137 = sbr.rel (0) target = $region41
    $region40: #{tpu_custom_call.1} parent=1 // pred_region
      %s1139 = ssub.s32 16, 16
      %1140 = vsyncadd [#allocation5], %s1139
      %s1142 = sshll.u32 [#allocation8], 4
      %s1143 = int_to_ptr.vmem [resolvable:$true] %s1142
      %1145 = dma.vmem_to_hbm [thread:$0]  %s1143, 16, %s7, [#allocation5]
    $region41: #{tpu_custom_call.1} parent=1 // pred_fallthru
      _
    // Predicated region
    $region42: #{tpu_custom_call.1} parent=1 // pred_check
      _
    $region43: #{tpu_custom_call.1} parent=1 // pred_check_branch
      %1147 = sbr.rel (0) target = $region45
    $region44: #{tpu_custom_call.1} parent=1 // pred_region
      %s1149 = ssub.s32 128, 128
      %1150 = vsyncadd [#allocation10], %s1149
      %s1152 = sshll.u32 [#allocation9], 4
      %s1153 = int_to_ptr.vmem [resolvable:$true] %s1152
      %1155 = dma.vmem_to_hbm [thread:$0]  %s1153, 128, %s8, [#allocation10]
    $region45: #{tpu_custom_call.1} parent=1 // pred_fallthru
      _
    // Predicated region
    $region46: #{tpu_custom_call.1} parent=1 // pred_check
      _
    $region47: #{tpu_custom_call.1} parent=1 // pred_check_branch
      %1157 = sbr.rel (0) target = $region49
    $region48: #{tpu_custom_call.1} parent=1 // pred_region
      %1158 = dma.done [#allocation5], 16
    $region49: #{tpu_custom_call.1} parent=1 // pred_fallthru
      _
    // Predicated region
    $region50: #{tpu_custom_call.1} parent=1 // pred_check
      _
    $region51: #{tpu_custom_call.1} parent=1 // pred_check_branch
      %1160 = sbr.rel (0) target = $region53
    $region52: #{tpu_custom_call.1} parent=1 // pred_region
      %1161 = dma.done [#allocation10], 128
    $region53: #{tpu_custom_call.1} parent=1 // pred_fallthru
      _
    %1162 = vsyncpa [#allocation4], 1
    %1163 = vsyncpa [#allocation7], 1
    %1164 = vsyncpa [#allocation5], 1
    %1165 = vsyncpa [#allocation10], 1

</llo_original>
